<compile_context>
chip_gen: v7x
topology: tpu7x:2x2x1
jax: 0.10.0
libtpu: 0.0.40
codegen_flags: <defaults>
</compile_context>

<pallas_src>
import functools

import jax
import jax.numpy as jnp
from jax.experimental import pallas as pl
from jax.experimental.pallas import tpu as pltpu


def _round_up(v, m):
    return ((v + m - 1) // m) * m


def _cdiv(a, b):
    return (a + b - 1) // b


def _sublane_multiple(*dtypes):
    # f32 -> 8 sublanes/vreg, bf16 -> 16, int8/fp8 -> 32 (sub-32-bit packs).
    m = 8
    for dt in dtypes:
        it = jnp.dtype(dt).itemsize
        m = max(m, {4: 8, 2: 16, 1: 32}.get(it, 8))
    return m


def msg_out_kernel(out_ref, x_ref, w_ref, b_ref, y_ref, *, agg_dim):
    # Left segment: relu(aggregated neighbor features). Pure copy+ReLU in the
    # native dtype; cast only if the output dtype differs.
    y_ref[:, :agg_dim] = jnp.maximum(out_ref[...], 0).astype(y_ref.dtype)

    # Right segment: relu(x @ W + b). MXU matmul with f32 accumulation; if the
    # caller passes bf16 x/W the MXU consumes them natively.
    h = jnp.dot(x_ref[...], w_ref[...], preferred_element_type=jnp.float32)
    h = h + b_ref[...].astype(jnp.float32)
    y_ref[:, agg_dim:] = jnp.maximum(h, 0.0).astype(y_ref.dtype)


def msg_out_forward(out, x, w, b, *, tm=1024, vmem_budget_bytes=48 * 1024 * 1024):
    """relu(concat([out, x @ w + b], axis=1)).

    out: [N, agg_dim]        aggregated neighbor features
    x:   [N, self_dim]       self node features (lower layer)
    w:   [self_dim, hidden]  nn.Linear weight already transposed
    b:   [hidden] or [1, hidden]
    """
    N, agg_dim = out.shape
    Nx, self_dim = x.shape
    assert Nx == N, "out and x must have the same number of rows"
    assert w.shape[0] == self_dim
    hidden_dim = w.shape[1]
    b = b.reshape(1, hidden_dim)

    y_dtype = jnp.result_type(out.dtype, jnp.result_type(x.dtype, w.dtype))
    y_cols = agg_dim + hidden_dim

    # ---- row tile selection --------------------------------------------------
    sub = _sublane_multiple(out.dtype, x.dtype, y_dtype)
    tm = max(sub, _round_up(min(int(tm), _round_up(N, sub)), sub))

    # v7x megacore: keep >=2 grid steps when tiles would still be large
    # (>=512 rows) so the "parallel" axis shards across both TensorCores.
    half_rows = _round_up(_cdiv(N, 2), sub)
    if half_rows >= 512:
        tm = min(tm, half_rows)

    def _bpe(dt):
        return jnp.dtype(dt).itemsize

    def _vmem_needed(tm_):
        tiles = tm_ * (agg_dim * _bpe(out.dtype)
                       + self_dim * _bpe(x.dtype)
                       + y_cols * _bpe(y_dtype))
        resident = self_dim * hidden_dim * _bpe(w.dtype) + hidden_dim * _bpe(b.dtype)
        return 2 * tiles + 2 * resident          # double-buffered tiles + W/bias

    # Fit the double-buffered working set under a budget safe for v7x (64 MiB).
    while tm > sub and _vmem_needed(tm) > vmem_budget_bytes:
        tm = max(sub, _round_up(tm // 2, sub))

    grid = (_cdiv(N, tm),)
    vmem_limit = int(min(max(_vmem_needed(tm) + (8 << 20), 32 << 20), 60 << 20))

    bytes_accessed = int(out.size * _bpe(out.dtype) + x.size * _bpe(x.dtype)
                         + w.size * _bpe(w.dtype) + b.size * _bpe(b.dtype)
                         + N * y_cols * _bpe(y_dtype))

    kernel = functools.partial(msg_out_kernel, agg_dim=agg_dim)

    # TODO(synk): structural option - fuse relu(out) into the producer of `out`
    # and keep only the linear+bias+relu here; left segment is pure bandwidth.
    return pl.pallas_call(
        kernel,
        out_shape=jax.ShapeDtypeStruct((N, y_cols), y_dtype),
        grid_spec=pltpu.PrefetchScalarGridSpec(
            num_scalar_prefetch=0,
            grid=grid,
            in_specs=[
                pl.BlockSpec((tm, agg_dim), lambda i: (i, 0)),          # out tile
                pl.BlockSpec((tm, self_dim), lambda i: (i, 0)),         # x tile
                pl.BlockSpec((self_dim, hidden_dim), lambda i: (0, 0)), # W resident
                pl.BlockSpec((1, hidden_dim), lambda i: (0, 0)),        # bias resident
            ],
            out_specs=pl.BlockSpec((tm, y_cols), lambda i: (i, 0)),
        ),
        compiler_params=pltpu.CompilerParams(
            dimension_semantics=("parallel",),
            vmem_limit_bytes=vmem_limit),
        cost_estimate=pl.CostEstimate(
            flops=2 * N * self_dim * hidden_dim,
            transcendentals=0,
            bytes_accessed=bytes_accessed),
    )(out, x, w, b)


def _reference(out, x, w_linear, b_linear):
    return jnp.maximum(
        jnp.concatenate([out, x @ w_linear.T + b_linear], axis=1), 0.0)


if __name__ == "__main__":
    key = jax.random.PRNGKey(0)

    def run_case(case_key, N, self_dim, hidden_dim, agg_dim):
        k_out, k_x, k_w, k_b, k_wc, k_bc = jax.random.split(case_key, 6)
        out = jax.random.normal(k_out, (N, agg_dim), dtype=jnp.float32)
        x = jax.random.normal(k_x, (N, self_dim), dtype=jnp.float32)

        # PyTorch-style uniform init for nn.Linear.
        bound = 1.0 / (self_dim ** 0.5)
        w_linear = jax.random.uniform(k_w, (hidden_dim, self_dim),
                                      minval=-bound, maxval=bound,
                                      dtype=jnp.float32)
        b_linear = jax.random.uniform(k_b, (hidden_dim,),
                                      minval=-bound, maxval=bound,
                                      dtype=jnp.float32)
        # linear_cluster: init-for-parity only, unused in forward.
        _w_cluster = jax.random.uniform(k_wc, (hidden_dim, self_dim),
                                        minval=-bound, maxval=bound,
                                        dtype=jnp.float32)
        _b_cluster = jax.random.uniform(k_bc, (hidden_dim,),
                                        minval=-bound, maxval=bound,
                                        dtype=jnp.float32)

        # Pre-transpose weight so the kernel does x @ W  (== x @ W_linear^T).
        y = msg_out_forward(out, x, w_linear.T, b_linear)
        y = jax.block_until_ready(y)

        ref = _reference(out, x, w_linear, b_linear)
        assert y.shape == (N, agg_dim + hidden_dim)
        assert jnp.allclose(y, ref, atol=1e-5, rtol=1e-5), \
            float(jnp.max(jnp.abs(y - ref)))

    k1, k2 = jax.random.split(key)
    # Toy shapes implied by the module.
    run_case(k1, N=8, self_dim=32, hidden_dim=32, agg_dim=32)
    # Ragged case: non-multiple-of-8 rows + non-128-aligned concat seam.
    run_case(k2, N=13, self_dim=48, hidden_dim=32, agg_dim=40)

    print("KERNEL_OK")
</pallas_src>

<mosaic_0001>
module attributes {stable_mosaic.version = 11 : i64} {
  func.func @msg_out_kernel(%arg0: i32, %arg1: memref<8x32xf32, #tpu.memory_space<vmem>>, %arg2: memref<8x32xf32, #tpu.memory_space<vmem>>, %arg3: memref<32x32xf32, #tpu.memory_space<vmem>>, %arg4: memref<1x32xf32, #tpu.memory_space<vmem>>, %arg5: memref<8x64xf32, #tpu.memory_space<vmem>>) attributes {dimension_semantics = [#tpu.dimension_semantics<parallel>], iteration_bounds = array<i64: 1>, scalar_prefetch = 0 : i64, scratch_operands = 0 : i64, tpu.core_type = #tpu.core_type<tc>, window_params = [{transform_indices = @transform_0, window_bounds = array<i64: 8, 32>}, {transform_indices = @transform_1, window_bounds = array<i64: 8, 32>}, {pipeline_mode = #tpu.pipeline_mode<synchronous>, transform_indices = @transform_2, window_bounds = array<i64: 32, 32>}, {pipeline_mode = #tpu.pipeline_mode<synchronous>, transform_indices = @transform_3, window_bounds = array<i64: 1, 32>}, {transform_indices = @transform_4, window_bounds = array<i64: 8, 64>}]} {
    %c0 = arith.constant 0 : index
    %c0_0 = arith.constant 0 : index
    %0 = vector.load %arg1[%c0, %c0_0] : memref<8x32xf32, #tpu.memory_space<vmem>>, vector<8x32xf32>
    %cst = arith.constant 0.000000e+00 : f32
    %1 = vector.broadcast %cst : f32 to vector<8x32xf32>
    %2 = arith.maximumf %0, %1 : vector<8x32xf32>
    %c0_1 = arith.constant 0 : index
    %c0_2 = arith.constant 0 : index
    %3 = vector.load %arg5[%c0_1, %c0_2] : memref<8x64xf32, #tpu.memory_space<vmem>>, vector<8x32xf32>
    tpu.vector_store %arg5[%c0_1, %c0_2], %2 {strides = array<i32>} : memref<8x64xf32, #tpu.memory_space<vmem>>, vector<8x32xf32>,
    %c0_3 = arith.constant 0 : index
    %c0_4 = arith.constant 0 : index
    %4 = vector.load %arg2[%c0_3, %c0_4] : memref<8x32xf32, #tpu.memory_space<vmem>>, vector<8x32xf32>
    %c0_5 = arith.constant 0 : index
    %c0_6 = arith.constant 0 : index
    %5 = vector.load %arg3[%c0_5, %c0_6] : memref<32x32xf32, #tpu.memory_space<vmem>>, vector<32x32xf32>
    %cst_7 = arith.constant dense<0.000000e+00> : vector<8x32xf32>
    %6 = tpu.matmul %4, %5, %cst_7 {dimension_numbers = #tpu.dot_dimension_numbers<[1], [0], [0], [1], [0, 0, 1, 1], [], []>} : vector<8x32xf32>, vector<32x32xf32>, vector<8x32xf32> -> vector<8x32xf32>
    %c0_8 = arith.constant 0 : index
    %c0_9 = arith.constant 0 : index
    %7 = vector.load %arg4[%c0_8, %c0_9] : memref<1x32xf32, #tpu.memory_space<vmem>>, vector<1x32xf32>
    %8 = vector.broadcast %7 : vector<1x32xf32> to vector<8x32xf32>
    %9 = arith.addf %6, %8 : vector<8x32xf32>
    %cst_10 = arith.constant 0.000000e+00 : f32
    %10 = vector.broadcast %cst_10 : f32 to vector<8x32xf32>
    %11 = arith.maximumf %9, %10 : vector<8x32xf32>
    %c0_11 = arith.constant 0 : index
    %c32 = arith.constant 32 : index
    %12 = vector.load %arg5[%c0_11, %c32] : memref<8x64xf32, #tpu.memory_space<vmem>>, vector<8x32xf32>
    tpu.vector_store %arg5[%c0_11, %c32], %11 {strides = array<i32>} : memref<8x64xf32, #tpu.memory_space<vmem>>, vector<8x32xf32>,
    return
  }
  func.func @transform_0(%arg0: i32) -> (i32, i32) {
    %c0_i32 = arith.constant 0 : i32
    %c0_i32_0 = arith.constant 0 : i32
    return %arg0, %c0_i32 : i32, i32
  }
  func.func @transform_1(%arg0: i32) -> (i32, i32) {
    %c0_i32 = arith.constant 0 : i32
    %c0_i32_0 = arith.constant 0 : i32
    return %arg0, %c0_i32 : i32, i32
  }
  func.func @transform_2(%arg0: i32) -> (i32, i32) {
    %c0_i32 = arith.constant 0 : i32
    %c0_i32_0 = arith.constant 0 : i32
    %c0_i32_1 = arith.constant 0 : i32
    return %c0_i32, %c0_i32_0 : i32, i32
  }
  func.func @transform_3(%arg0: i32) -> (i32, i32) {
    %c0_i32 = arith.constant 0 : i32
    %c0_i32_0 = arith.constant 0 : i32
    %c0_i32_1 = arith.constant 0 : i32
    return %c0_i32, %c0_i32_0 : i32, i32
  }
  func.func @transform_4(%arg0: i32) -> (i32, i32) {
    %c0_i32 = arith.constant 0 : i32
    %c0_i32_0 = arith.constant 0 : i32
    return %arg0, %c0_i32 : i32, i32
  }
}

</mosaic_0001>

<llo_original>
// kernel: tpu_custom_call.1
$region0: #{tpu_custom_call.1}
  #allocation0 [shape = 'u32[]', space=smem, size = 0x4, offset = 0x4, fixed_abs, tag = 'smem constant byte address 0x4 - core index']
  #allocation1 [shape = 'u32[144,128]{1,0:T(1,128)}', space=vmem, size = 0x12000, scoped, tag = 'internal scratch']
  %s0 = inlined_call_operand.hbm [shape: f32[8,32], index: 0, kind: input, shape index: {}]
  %s1 = inlined_call_operand.hbm [shape: f32[8,32], index: 1, kind: input, shape index: {}]
  %s2 = inlined_call_operand.hbm [shape: f32[32,32], index: 2, kind: input, shape index: {}]
  %s3 = inlined_call_operand.vmem [shape: f32[1,32], index: 3, kind: input, shape index: {}]
  %s4 = inlined_call_operand.hbm [shape: f32[8,64], index: 4, kind: output, shape index: {}]
  %s5 = sld [smem:[#allocation0]]
  $region38: #{tpu_custom_call.1} parent=0
    _
  %s7 = ssub.s32 1, %s5
  %s8 = scalar_select 0, %s7, %s5
  $region1: #{tpu_custom_call.1} parent=0
    #allocation2 [shape = 'u8[4096]{0}', space=vmem, size = 0x1000, scoped, tag = 'input window, operand 0, single buffered']
    #allocation3 [shape = 's32[1]{0}', space=sflag, size = 0x4, scoped, tag = 'scoped memory for tpu_custom_call.1']
    #allocation4 [shape = 's32[1]{0}', space=sflag, size = 0x4, scoped, tag = 'scoped memory for tpu_custom_call.1']
    #allocation5 [shape = 'u8[4096]{0}', space=vmem, size = 0x1000, scoped, tag = 'input window, operand 1, single buffered']
    #allocation6 [shape = 's32[1]{0}', space=sflag, size = 0x4, scoped, tag = 'scoped memory for tpu_custom_call.1']
    #allocation7 [shape = 'u8[16384]{0}', space=vmem, size = 0x4000, scoped, tag = 'input window, operand 2, single buffered']
    #allocation8 [shape = 'u8[4096]{0}', space=vmem, size = 0x1000, scoped, tag = 'output window, operand 0, single buffered']
    %9 = vsyncpa [#allocation3], 0
    %10 = vsyncpa [#allocation6], 0
    %11 = vsyncpa [#allocation4], 0
    // Predicated region
    $region2: #{tpu_custom_call.1} parent=1 // pred_check
      _
    $region3: #{tpu_custom_call.1} parent=1 // pred_check_branch
      %13 = sbr.rel (0) target = $region5
    $region4: #{tpu_custom_call.1} parent=1 // pred_region
      %s15 = ssub.s32 128, 128
      %16 = vsyncadd [#allocation3], %s15
      %s18 = sshll.u32 [#allocation2], 4
      %s19 = int_to_ptr.vmem [resolvable:$true] %s18
      %21 = dma.hbm_to_vmem [thread:$0]  %s0, 128, %s19, [#allocation3]
    $region5: #{tpu_custom_call.1} parent=1 // pred_fallthru
      _
    // Predicated region
    $region6: #{tpu_custom_call.1} parent=1 // pred_check
      _
    $region7: #{tpu_custom_call.1} parent=1 // pred_check_branch
      %23 = sbr.rel (0) target = $region9
    $region8: #{tpu_custom_call.1} parent=1 // pred_region
      %s25 = ssub.s32 128, 128
      %26 = vsyncadd [#allocation6], %s25
      %s28 = sshll.u32 [#allocation5], 4
      %s29 = int_to_ptr.vmem [resolvable:$true] %s28
      %31 = dma.hbm_to_vmem [thread:$0]  %s1, 128, %s29, [#allocation6]
    $region9: #{tpu_custom_call.1} parent=1 // pred_fallthru
      _
    // Predicated region
    $region10: #{tpu_custom_call.1} parent=1 // pred_check
      _
    $region11: #{tpu_custom_call.1} parent=1 // pred_check_branch
      %33 = sbr.rel (0) target = $region13
    $region12: #{tpu_custom_call.1} parent=1 // pred_region
      %s35 = ssub.s32 512, 512
      %36 = vsyncadd [#allocation6], %s35
      %s37 = sshll.u32 [#allocation7], 4
      %s38 = int_to_ptr.vmem [resolvable:$true] %s37
      %43 = dma.hbm_to_vmem [thread:$0]  %s2, 512, %s38, [#allocation6], 128, 128, 8
    $region13: #{tpu_custom_call.1} parent=1 // pred_fallthru
      _
    // Predicated region
    $region14: #{tpu_custom_call.1} parent=1 // pred_check
      _
    $region15: #{tpu_custom_call.1} parent=1 // pred_check_branch
      %45 = sbr.rel (0) target = $region17
    $region16: #{tpu_custom_call.1} parent=1 // pred_region
      _
    $region17: #{tpu_custom_call.1} parent=1 // pred_fallthru
      _
    // Predicated region
    $region18: #{tpu_custom_call.1} parent=1 // pred_check
      _
    $region19: #{tpu_custom_call.1} parent=1 // pred_check_branch
      %47 = sbr.rel (0) target = $region21
    $region20: #{tpu_custom_call.1} parent=1 // pred_region
      %48 = dma.done [#allocation3], 128
    $region21: #{tpu_custom_call.1} parent=1 // pred_fallthru
      _
    // Predicated region
    $region22: #{tpu_custom_call.1} parent=1 // pred_check
      _
    $region23: #{tpu_custom_call.1} parent=1 // pred_check_branch
      %50 = sbr.rel (0) target = $region25
    $region24: #{tpu_custom_call.1} parent=1 // pred_region
      %51 = dma.done [#allocation6], 128
    $region25: #{tpu_custom_call.1} parent=1 // pred_fallthru
      _
    // Predicated region
    $region26: #{tpu_custom_call.1} parent=1 // pred_check
      _
    $region27: #{tpu_custom_call.1} parent=1 // pred_check_branch
      %53 = sbr.rel (0) target = $region29
    $region28: #{tpu_custom_call.1} parent=1 // pred_region
      %54 = dma.done [#allocation6], 512
    $region29: #{tpu_custom_call.1} parent=1 // pred_fallthru
      _
    %v55 = vld [vmem:[#allocation2] sm:$0xff]
    %v56 = vmax.f32 %v55, 0.0
    %vm57 = vcmask 261120
    %58 = vst.msk [vmem:[#allocation8] sm:$0xff] %vm57, %v56
    %v59 = vld [vmem:[#allocation5] sm:$0xff]
    %v60 = vld [vmem:[#allocation7] sm:$0xff]
    %v61 = vld [vmem:[#allocation7 + $0x8] sm:$0xff]
    %v62 = vld [vmem:[#allocation7 + $0x10] sm:$0xff]
    %v63 = vld [vmem:[#allocation7 + $0x18] sm:$0xff]
    %v64 = vld [vmem:[%s3] sm:$0x1]
    %v66 = vlaneseq
    %v67 = vshrl.u32 %v66, 7
    %v68 = vsub.s32 0, %v67
    %v69 = vrot.slane %v64, %v68
    %v72 = vsel %vm57, %v59, 0
    %74 = vmatprep.subr.mxu0 0.0
    %75 = vmatpush1.msra.mxu0 %v60
    %76 = vmatprep.subr.mxu0 0.0
    %77 = vmatpush1.msra.mxu0 %v61
    %78 = vmatprep.subr.mxu0 0.0
    %79 = vmatpush1.msra.mxu0 %v62
    %80 = vmatprep.subr.mxu0 0.0
    %81 = vmatpush1.msra.mxu0 %v63
    %82 = vmatprep.subr.mxu0 0.0
    %83 = vmatpush1.msra.mxu0 0.0
    %84 = vmatprep.subr.mxu0 0.0
    %85 = vmatpush1.msra.mxu0 0.0
    %86 = vmatprep.subr.mxu0 0.0
    %87 = vmatpush1.msra.mxu0 0.0
    %88 = vmatprep.subr.mxu0 0.0
    %89 = vmatpush1.msra.mxu0 0.0
    %90 = vmatprep.subr.mxu0 0.0
    %91 = vmatpush1.msra.mxu0 0.0
    %92 = vmatprep.subr.mxu0 0.0
    %93 = vmatpush1.msra.mxu0 0.0
    %94 = vmatprep.subr.mxu0 0.0
    %95 = vmatpush1.msra.mxu0 0.0
    %96 = vmatprep.subr.mxu0 0.0
    %97 = vmatpush1.msra.mxu0 0.0
    %98 = vmatprep.subr.mxu0 0.0
    %99 = vmatpush1.msra.mxu0 0.0
    %100 = vmatprep.subr.mxu0 0.0
    %101 = vmatpush1.msra.mxu0 0.0
    %102 = vmatprep.subr.mxu0 0.0
    %103 = vmatpush1.msra.mxu0 0.0
    %104 = vmatprep.subr.mxu0 0.0
    %105 = vmatpush1.msra.mxu0 0.0
    %106 = vmatprep.subr.mxu0 0.0
    %107 = vmatpush1.msra.mxu0 0.0
    %108 = vmatprep.subr.mxu0 0.0
    %109 = vmatpush1.msra.mxu0 0.0
    %110 = vmatprep.subr.mxu0 0.0
    %111 = vmatpush1.msra.mxu0 0.0
    %112 = vmatprep.subr.mxu0 0.0
    %113 = vmatpush1.msra.mxu0 0.0
    %114 = vmatprep.subr.mxu0 0.0
    %115 = vmatpush1.msra.mxu0 0.0
    %116 = vmatprep.subr.mxu0 0.0
    %117 = vmatpush1.msra.mxu0 0.0
    %118 = vmatprep.subr.mxu0 0.0
    %119 = vmatpush1.msra.mxu0 0.0
    %120 = vmatprep.subr.mxu0 0.0
    %121 = vmatpush1.msra.mxu0 0.0
    %122 = vmatprep.subr.mxu0 0.0
    %123 = vmatpush1.msra.mxu0 0.0
    %124 = vmatprep.subr.mxu0 0.0
    %125 = vmatpush1.msra.mxu0 0.0
    %126 = vmatprep.subr.mxu0 0.0
    %127 = vmatpush1.msra.mxu0 0.0
    %128 = vmatprep.subr.mxu0 0.0
    %129 = vmatpush1.msra.mxu0 0.0
    %130 = vmatprep.subr.mxu0 0.0
    %131 = vmatpush1.msra.mxu0 0.0
    %132 = vmatprep.subr.mxu0 0.0
    %133 = vmatpush1.msra.mxu0 0.0
    %134 = vmatprep.subr.mxu0 0.0
    %135 = vmatpush1.msra.mxu0 0.0
    %136 = vmatprep.subr.mxu0 0.0
    %137 = vmatpush1.msra.mxu0 0.0
    %138 = vmatprep.mubr.f32.mxu0 0.0
    %139 = vmatmul.mubr.f32.gmra.mrb[0].mxu0 %v72
    %v140 = vpop.f32.mrb[0].mxu0
    %v141 = vadd.f32 %v69, %v140
    %v142 = vpop.f32.mrb[0].mxu0
    %143 = vdwg.mxu0
    %v144 = vmax.f32 %v141, 0.0
    %146 = vrot.lane.b32.xlu0 %v144, 32
    %v147 = vpop.permute.xlu0 %146
    %vm149 = vcmask 523520
    %150 = vst.msk [vmem:[#allocation8] sm:$0xff] %vm149, %v147
    // Predicated region
    $region30: #{tpu_custom_call.1} parent=1 // pred_check
      _
    $region31: #{tpu_custom_call.1} parent=1 // pred_check_branch
      %152 = sbr.rel (0) target = $region33
    $region32: #{tpu_custom_call.1} parent=1 // pred_region
      %s154 = ssub.s32 128, 128
      %155 = vsyncadd [#allocation4], %s154
      %s157 = sshll.u32 [#allocation8], 4
      %s158 = int_to_ptr.vmem [resolvable:$true] %s157
      %160 = dma.vmem_to_hbm [thread:$0]  %s158, 128, %s4, [#allocation4]
    $region33: #{tpu_custom_call.1} parent=1 // pred_fallthru
      _
    // Predicated region
    $region34: #{tpu_custom_call.1} parent=1 // pred_check
      _
    $region35: #{tpu_custom_call.1} parent=1 // pred_check_branch
      %162 = sbr.rel (0) target = $region37
    $region36: #{tpu_custom_call.1} parent=1 // pred_region
      %163 = dma.done [#allocation4], 128
    $region37: #{tpu_custom_call.1} parent=1 // pred_fallthru
      _
    %164 = vsyncpa [#allocation3], 1
    %165 = vsyncpa [#allocation6], 1
    %166 = vsyncpa [#allocation4], 1

</llo_original>
